<compile_context>
chip_gen: v6e
topology: v6e:2x2x1
jax: 0.10.0
libtpu: 0.0.40
codegen_flags: <defaults>
</compile_context>

<pallas_src>
import jax
import jax.numpy as jnp
from jax.experimental import pallas as pl
from jax.experimental.pallas import tpu as pltpu


GROUP = 32  # samples packed per grouped row: 32*8 = 256 and 32*20 = 640 lanes


def _grouped_linear_kernel(x_ref, w_ref, b_ref, o_ref):
    # x_ref: [TM_G, GROUP*in_dim]              lane-dense batch tile
    # w_ref: [GROUP*in_dim, GROUP*out_dim]     block-diag weight, (K, N) MXU-native
    # b_ref: [1, GROUP*out_dim]                tiled bias row (VMEM-resident)
    # o_ref: [TM_G, GROUP*out_dim]
    acc = jnp.dot(x_ref[...], w_ref[...], preferred_element_type=jnp.float32)
    o_ref[...] = (acc + b_ref[...]).astype(o_ref.dtype)


def _pick_group_tile(n_rows, max_tile):
    """Pick the grouped-row tile (sublane dim of the x/out blocks).

    - Tiny batches: one block equal to the full extent (always a legal block).
    - Otherwise: multiple-of-8 tile, sized so there are >= 2 tiles (megacore
      on v7x) and capped so the tile stays comfortably inside VMEM.
    """
    if n_rows <= 16:
        return n_rows
    tm = min(max_tile, (n_rows // 2 // 8) * 8)
    return max(tm, 8)


def perceptron_forward(x, weight, bias, *, max_tile_rows=1024):
    """x: [B, in_dim], weight: [out_dim, in_dim] (PyTorch layout), bias: [out_dim]."""
    B, in_dim = x.shape
    out_dim = weight.shape[0]
    kin = GROUP * in_dim      # 256
    kout = GROUP * out_dim    # 640

    # Pad batch only to a multiple of the group size (32); padded rows produce
    # bias-only outputs that are sliced off at the end.
    b_pad = ((B + GROUP - 1) // GROUP) * GROUP
    if b_pad != B:
        x_in = jnp.zeros((b_pad, in_dim), x.dtype).at[:B].set(x)
    else:
        x_in = x

    n_rows = b_pad // GROUP
    xg = x_in.reshape(n_rows, kin)  # contiguous row-major reshape -> free

    # Lane-dense block-diagonal weight in (K, N) orientation + tiled bias row.
    w_big = jnp.kron(jnp.eye(GROUP, dtype=weight.dtype), weight.T)        # [256, 640]
    b_big = jnp.tile(bias.reshape(1, out_dim), (1, GROUP)).astype(x.dtype)  # [1, 640]

    tm = _pick_group_tile(n_rows, max_tile_rows)
    n_tiles = (n_rows + tm - 1) // tm  # ragged last tile -> masked edge block

    out_g = pl.pallas_call(
        _grouped_linear_kernel,
        out_shape=jax.ShapeDtypeStruct((n_rows, kout), x.dtype),
        grid_spec=pltpu.PrefetchScalarGridSpec(
            num_scalar_prefetch=0,
            grid=(n_tiles,),
            in_specs=[
                # batch tile walks the grid (lane-dense: 256 lanes)
                pl.BlockSpec((tm, kin), lambda i: (i, 0)),
                # weight / bias: constant block index -> fetched once, stay in VMEM
                pl.BlockSpec((kin, kout), lambda i: (0, 0)),
                pl.BlockSpec((1, kout), lambda i: (0, 0)),
            ],
            # lane-dense output (640 lanes) -> unmasked vst, contiguous writeback
            out_specs=pl.BlockSpec((tm, kout), lambda i: (i, 0)),
        ),
        compiler_params=pltpu.CompilerParams(
            # batch tiles are independent -> megacore sharding (matters on v7x)
            dimension_semantics=("parallel",),
            # worst-case double-buffered footprint ~9 MiB at tm=1024; this cap
            # is safe on v5e/v6e (128 MiB) and v7x (64 MiB physical VMEM)
            vmem_limit_bytes=32 * 1024 * 1024,
        ),
    )(xg, w_big, b_big)

    out = out_g.reshape(b_pad, out_dim)  # contiguous reshape -> free
    return out[:B] if b_pad != B else out


if __name__ == "__main__":
    in_dim, out_dim, batch = 8, 20, 2

    key = jax.random.PRNGKey(0)
    k_x, k_w, k_b = jax.random.split(key, 3)

    # Deterministic parameter init.
    # Xavier-normal for the weight (matches torch.nn.init.xavier_normal_):
    # std = sqrt(2 / (fan_in + fan_out))
    xavier_std = (2.0 / (in_dim + out_dim)) ** 0.5
    weight = jax.random.normal(k_w, (out_dim, in_dim), dtype=jnp.float32) * xavier_std
    # PyTorch Linear default bias init: U(-1/sqrt(fan_in), 1/sqrt(fan_in))
    bound = 1.0 / (in_dim ** 0.5)
    bias = jax.random.uniform(k_b, (out_dim,), dtype=jnp.float32,
                              minval=-bound, maxval=bound)

    x = jax.random.normal(k_x, (batch, in_dim), dtype=jnp.float32)

    out = perceptron_forward(x, weight, bias)
    jax.block_until_ready(out)

    # Reference check against plain JAX (toy batch; exercises pad-to-32 path).
    ref = x @ weight.T + bias
    assert out.shape == (batch, out_dim)
    assert jnp.allclose(out, ref, atol=1e-5, rtol=1e-5)

    # Non-group-aligned batch: single-tile path (R <= 16) + pad/slice.
    x_mid = jax.random.normal(jax.random.PRNGKey(1), (300, in_dim), dtype=jnp.float32)
    out_mid = perceptron_forward(x_mid, weight, bias)
    jax.block_until_ready(out_mid)
    ref_mid = x_mid @ weight.T + bias
    assert out_mid.shape == (300, out_dim)
    assert jnp.allclose(out_mid, ref_mid, atol=1e-5, rtol=1e-5)

    # Multi-tile path with a ragged last tile (masked edge block): B=1030 ->
    # 33 grouped rows, tile=16 -> 3 tiles, last tile overhangs and is masked.
    x_big = jax.random.normal(jax.random.PRNGKey(2), (1030, in_dim), dtype=jnp.float32)
    out_big = perceptron_forward(x_big, weight, bias)
    jax.block_until_ready(out_big)
    ref_big = x_big @ weight.T + bias
    assert out_big.shape == (1030, out_dim)
    assert jnp.allclose(out_big, ref_big, atol=1e-5, rtol=1e-5)

    # Cleanly divisible 2-tile path (exercises megacore-friendly tiling): B=2048
    # -> 64 grouped rows, tile=32 -> exactly 2 tiles, no padding, no slicing.
    x_even = jax.random.normal(jax.random.PRNGKey(3), (2048, in_dim), dtype=jnp.float32)
    out_even = perceptron_forward(x_even, weight, bias)
    jax.block_until_ready(out_even)
    ref_even = x_even @ weight.T + bias
    assert out_even.shape == (2048, out_dim)
    assert jnp.allclose(out_even, ref_even, atol=1e-5, rtol=1e-5)

    print("KERNEL_OK")
</pallas_src>

<mosaic_0001>
module attributes {stable_mosaic.version = 11 : i64} {
  func.func @_grouped_linear_kernel(%arg0: i32, %arg1: memref<1x256xf32, #tpu.memory_space<vmem>>, %arg2: memref<256x640xf32, #tpu.memory_space<vmem>>, %arg3: memref<1x640xf32, #tpu.memory_space<vmem>>, %arg4: memref<1x640xf32, #tpu.memory_space<vmem>>) attributes {dimension_semantics = [#tpu.dimension_semantics<parallel>], iteration_bounds = array<i64: 1>, scalar_prefetch = 0 : i64, scratch_operands = 0 : i64, tpu.core_type = #tpu.core_type<tc>, window_params = [{transform_indices = @transform_0, window_bounds = array<i64: 1, 256>}, {pipeline_mode = #tpu.pipeline_mode<synchronous>, transform_indices = @transform_1, window_bounds = array<i64: 256, 640>}, {pipeline_mode = #tpu.pipeline_mode<synchronous>, transform_indices = @transform_2, window_bounds = array<i64: 1, 640>}, {transform_indices = @transform_3, window_bounds = array<i64: 1, 640>}]} {
    %c0 = arith.constant 0 : index
    %c0_0 = arith.constant 0 : index
    %0 = vector.load %arg1[%c0, %c0_0] : memref<1x256xf32, #tpu.memory_space<vmem>>, vector<1x256xf32>
    %c0_1 = arith.constant 0 : index
    %c0_2 = arith.constant 0 : index
    %1 = vector.load %arg2[%c0_1, %c0_2] : memref<256x640xf32, #tpu.memory_space<vmem>>, vector<256x640xf32>
    %cst = arith.constant dense<0.000000e+00> : vector<1x640xf32>
    %2 = tpu.matmul %0, %1, %cst {dimension_numbers = #tpu.dot_dimension_numbers<[1], [0], [0], [1], [0, 0, 1, 1], [], []>} : vector<1x256xf32>, vector<256x640xf32>, vector<1x640xf32> -> vector<1x640xf32>
    %c0_3 = arith.constant 0 : index
    %c0_4 = arith.constant 0 : index
    %3 = vector.load %arg3[%c0_3, %c0_4] : memref<1x640xf32, #tpu.memory_space<vmem>>, vector<1x640xf32>
    %4 = arith.addf %2, %3 : vector<1x640xf32>
    %c0_5 = arith.constant 0 : index
    %c0_6 = arith.constant 0 : index
    %5 = vector.load %arg4[%c0_5, %c0_6] : memref<1x640xf32, #tpu.memory_space<vmem>>, vector<1x640xf32>
    tpu.vector_store %arg4[%c0_5, %c0_6], %4 {strides = array<i32>} : memref<1x640xf32, #tpu.memory_space<vmem>>, vector<1x640xf32>,
    return
  }
  func.func @transform_0(%arg0: i32) -> (i32, i32) {
    %c0_i32 = arith.constant 0 : i32
    %c0_i32_0 = arith.constant 0 : i32
    return %arg0, %c0_i32 : i32, i32
  }
  func.func @transform_1(%arg0: i32) -> (i32, i32) {
    %c0_i32 = arith.constant 0 : i32
    %c0_i32_0 = arith.constant 0 : i32
    %c0_i32_1 = arith.constant 0 : i32
    return %c0_i32, %c0_i32_0 : i32, i32
  }
  func.func @transform_2(%arg0: i32) -> (i32, i32) {
    %c0_i32 = arith.constant 0 : i32
    %c0_i32_0 = arith.constant 0 : i32
    %c0_i32_1 = arith.constant 0 : i32
    return %c0_i32, %c0_i32_0 : i32, i32
  }
  func.func @transform_3(%arg0: i32) -> (i32, i32) {
    %c0_i32 = arith.constant 0 : i32
    %c0_i32_0 = arith.constant 0 : i32
    return %arg0, %c0_i32 : i32, i32
  }
}

</mosaic_0001>

<llo_original>
// kernel: tpu_custom_call.1
$region0: #{tpu_custom_call.1}
  #allocation0 [shape = 'u32[]', space=smem, size = 0x4, offset = 0x4, fixed_abs, tag = 'smem constant byte address 0x4 - core index']
  #allocation1 [shape = 'u32[144,128]{1,0:T(1,128)}', space=vmem, size = 0x12000, scoped, tag = 'internal scratch']
  %s0 = inlined_call_operand.hbm [shape: f32[1,256], index: 0, kind: input, shape index: {}]
  %s1 = inlined_call_operand.hbm [shape: f32[256,640], index: 1, kind: input, shape index: {}]
  %s2 = inlined_call_operand.hbm [shape: f32[1,640], index: 2, kind: input, shape index: {}]
  %s3 = inlined_call_operand.hbm [shape: f32[1,640], index: 3, kind: output, shape index: {}]
  %s4 = sld [smem:[#allocation0]]
  $region34: #{tpu_custom_call.1} parent=0
    _
  %s6 = ssub.s32 1, %s4
  %s7 = scalar_select 0, %s6, %s4
  $region1: #{tpu_custom_call.1} parent=0
    #allocation2 [shape = 'u8[1024]{0}', space=vmem, size = 0x400, scoped, tag = 'input window, operand 0, single buffered']
    #allocation3 [shape = 's32[1]{0}', space=sflag, size = 0x4, scoped, tag = 'scoped memory for tpu_custom_call.1']
    #allocation4 [shape = 's32[1]{0}', space=sflag, size = 0x4, scoped, tag = 'scoped memory for tpu_custom_call.1']
    #allocation5 [shape = 'u8[655360]{0}', space=vmem, size = 0xa0000, scoped, tag = 'input window, operand 1, single buffered']
    #allocation6 [shape = 's32[1]{0}', space=sflag, size = 0x4, scoped, tag = 'scoped memory for tpu_custom_call.1']
    #allocation7 [shape = 'u8[2560]{0}', space=vmem, size = 0xc00, scoped, tag = 'input window, operand 2, single buffered']
    #allocation8 [shape = 'u8[2560]{0}', space=vmem, size = 0xc00, scoped, tag = 'output window, operand 0, single buffered']
    %8 = vsyncpa [#allocation3], 0
    %9 = vsyncpa [#allocation6], 0
    %10 = vsyncpa [#allocation4], 0
    // Predicated region
    $region2: #{tpu_custom_call.1} parent=1 // pred_check
      _
    $region3: #{tpu_custom_call.1} parent=1 // pred_check_branch
      %12 = sbr.rel (0) target = $region5
    $region4: #{tpu_custom_call.1} parent=1 // pred_region
      %s14 = ssub.s32 32, 32
      %15 = vsyncadd [#allocation3], %s14
      %s17 = sshll.u32 [#allocation2], 4
      %s18 = int_to_ptr.vmem [resolvable:$true] %s17
      %20 = dma.hbm_to_vmem [thread:$0]  %s0, 32, %s18, [#allocation3]
    $region5: #{tpu_custom_call.1} parent=1 // pred_fallthru
      _
    // Predicated region
    $region6: #{tpu_custom_call.1} parent=1 // pred_check
      _
    $region7: #{tpu_custom_call.1} parent=1 // pred_check_branch
      %22 = sbr.rel (0) target = $region9
    $region8: #{tpu_custom_call.1} parent=1 // pred_region
      %s24 = ssub.s32 20480, 20480
      %25 = vsyncadd [#allocation6], %s24
      %s26 = sshll.u32 [#allocation5], 4
      %s27 = int_to_ptr.vmem [resolvable:$true] %s26
      %32 = dma.hbm_to_vmem [thread:$0]  %s1, 20480, %s27, [#allocation6], 640, 640, 40
    $region9: #{tpu_custom_call.1} parent=1 // pred_fallthru
      _
    // Predicated region
    $region10: #{tpu_custom_call.1} parent=1 // pred_check
      _
    $region11: #{tpu_custom_call.1} parent=1 // pred_check_branch
      %34 = sbr.rel (0) target = $region13
    $region12: #{tpu_custom_call.1} parent=1 // pred_region
      %s36 = ssub.s32 80, 80
      %37 = vsyncadd [#allocation6], %s36
      %s39 = sshll.u32 [#allocation7], 4
      %s40 = int_to_ptr.vmem [resolvable:$true] %s39
      %42 = dma.hbm_to_vmem [thread:$0]  %s2, 80, %s40, [#allocation6]
    $region13: #{tpu_custom_call.1} parent=1 // pred_fallthru
      _
    // Predicated region
    $region14: #{tpu_custom_call.1} parent=1 // pred_check
      _
    $region15: #{tpu_custom_call.1} parent=1 // pred_check_branch
      %44 = sbr.rel (0) target = $region17
    $region16: #{tpu_custom_call.1} parent=1 // pred_region
      %45 = dma.done [#allocation3], 32
    $region17: #{tpu_custom_call.1} parent=1 // pred_fallthru
      _
    // Predicated region
    $region18: #{tpu_custom_call.1} parent=1 // pred_check
      _
    $region19: #{tpu_custom_call.1} parent=1 // pred_check_branch
      %47 = sbr.rel (0) target = $region21
    $region20: #{tpu_custom_call.1} parent=1 // pred_region
      %48 = dma.done [#allocation6], 20480
    $region21: #{tpu_custom_call.1} parent=1 // pred_fallthru
      _
    // Predicated region
    $region22: #{tpu_custom_call.1} parent=1 // pred_check
      _
    $region23: #{tpu_custom_call.1} parent=1 // pred_check_branch
      %50 = sbr.rel (0) target = $region25
    $region24: #{tpu_custom_call.1} parent=1 // pred_region
      %51 = dma.done [#allocation6], 80
    $region25: #{tpu_custom_call.1} parent=1 // pred_fallthru
      _
    %v52 = vld [vmem:[#allocation2] sm:$0x3]
    %v53 = vld [vmem:[#allocation5] sm:$0xff]
    %v54 = vld [vmem:[#allocation5 + $0x8] sm:$0xff]
    %v55 = vld [vmem:[#allocation5 + $0x10] sm:$0xff]
    %v56 = vld [vmem:[#allocation5 + $0x18] sm:$0xff]
    %v57 = vld [vmem:[#allocation5 + $0x20] sm:$0xff]
    %v58 = vld [vmem:[#allocation5 + $0x28] sm:$0xff]
    %v59 = vld [vmem:[#allocation5 + $0x30] sm:$0xff]
    %v60 = vld [vmem:[#allocation5 + $0x38] sm:$0xff]
    %v61 = vld [vmem:[#allocation5 + $0x40] sm:$0xff]
    %v62 = vld [vmem:[#allocation5 + $0x48] sm:$0xff]
    %v63 = vld [vmem:[#allocation5 + $0x50] sm:$0xff]
    %v64 = vld [vmem:[#allocation5 + $0x58] sm:$0xff]
    %v65 = vld [vmem:[#allocation5 + $0x60] sm:$0xff]
    %v66 = vld [vmem:[#allocation5 + $0x68] sm:$0xff]
    %v67 = vld [vmem:[#allocation5 + $0x70] sm:$0xff]
    %v68 = vld [vmem:[#allocation5 + $0x78] sm:$0xff]
    %v69 = vld [vmem:[#allocation5 + $0x80] sm:$0xff]
    %v70 = vld [vmem:[#allocation5 + $0x88] sm:$0xff]
    %v71 = vld [vmem:[#allocation5 + $0x90] sm:$0xff]
    %v72 = vld [vmem:[#allocation5 + $0x98] sm:$0xff]
    %v73 = vld [vmem:[#allocation5 + $0xa0] sm:$0xff]
    %v74 = vld [vmem:[#allocation5 + $0xa8] sm:$0xff]
    %v75 = vld [vmem:[#allocation5 + $0xb0] sm:$0xff]
    %v76 = vld [vmem:[#allocation5 + $0xb8] sm:$0xff]
    %v77 = vld [vmem:[#allocation5 + $0xc0] sm:$0xff]
    %v78 = vld [vmem:[#allocation5 + $0xc8] sm:$0xff]
    %v79 = vld [vmem:[#allocation5 + $0xd0] sm:$0xff]
    %v80 = vld [vmem:[#allocation5 + $0xd8] sm:$0xff]
    %v81 = vld [vmem:[#allocation5 + $0xe0] sm:$0xff]
    %v82 = vld [vmem:[#allocation5 + $0xe8] sm:$0xff]
    %v83 = vld [vmem:[#allocation5 + $0xf0] sm:$0xff]
    %v84 = vld [vmem:[#allocation5 + $0xf8] sm:$0xff]
    %v85 = vld [vmem:[#allocation5 + $0x100] sm:$0xff]
    %v86 = vld [vmem:[#allocation5 + $0x108] sm:$0xff]
    %v87 = vld [vmem:[#allocation5 + $0x110] sm:$0xff]
    %v88 = vld [vmem:[#allocation5 + $0x118] sm:$0xff]
    %v89 = vld [vmem:[#allocation5 + $0x120] sm:$0xff]
    %v90 = vld [vmem:[#allocation5 + $0x128] sm:$0xff]
    %v91 = vld [vmem:[#allocation5 + $0x130] sm:$0xff]
    %v92 = vld [vmem:[#allocation5 + $0x138] sm:$0xff]
    %v93 = vld [vmem:[#allocation5 + $0x140] sm:$0xff]
    %v94 = vld [vmem:[#allocation5 + $0x148] sm:$0xff]
    %v95 = vld [vmem:[#allocation5 + $0x150] sm:$0xff]
    %v96 = vld [vmem:[#allocation5 + $0x158] sm:$0xff]
    %v97 = vld [vmem:[#allocation5 + $0x160] sm:$0xff]
    %v98 = vld [vmem:[#allocation5 + $0x168] sm:$0xff]
    %v99 = vld [vmem:[#allocation5 + $0x170] sm:$0xff]
    %v100 = vld [vmem:[#allocation5 + $0x178] sm:$0xff]
    %v101 = vld [vmem:[#allocation5 + $0x180] sm:$0xff]
    %v102 = vld [vmem:[#allocation5 + $0x188] sm:$0xff]
    %v103 = vld [vmem:[#allocation5 + $0x190] sm:$0xff]
    %v104 = vld [vmem:[#allocation5 + $0x198] sm:$0xff]
    %v105 = vld [vmem:[#allocation5 + $0x1a0] sm:$0xff]
    %v106 = vld [vmem:[#allocation5 + $0x1a8] sm:$0xff]
    %v107 = vld [vmem:[#allocation5 + $0x1b0] sm:$0xff]
    %v108 = vld [vmem:[#allocation5 + $0x1b8] sm:$0xff]
    %v109 = vld [vmem:[#allocation5 + $0x1c0] sm:$0xff]
    %v110 = vld [vmem:[#allocation5 + $0x1c8] sm:$0xff]
    %v111 = vld [vmem:[#allocation5 + $0x1d0] sm:$0xff]
    %v112 = vld [vmem:[#allocation5 + $0x1d8] sm:$0xff]
    %v113 = vld [vmem:[#allocation5 + $0x1e0] sm:$0xff]
    %v114 = vld [vmem:[#allocation5 + $0x1e8] sm:$0xff]
    %v115 = vld [vmem:[#allocation5 + $0x1f0] sm:$0xff]
    %v116 = vld [vmem:[#allocation5 + $0x1f8] sm:$0xff]
    %v117 = vld [vmem:[#allocation5 + $0x200] sm:$0xff]
    %v118 = vld [vmem:[#allocation5 + $0x208] sm:$0xff]
    %v119 = vld [vmem:[#allocation5 + $0x210] sm:$0xff]
    %v120 = vld [vmem:[#allocation5 + $0x218] sm:$0xff]
    %v121 = vld [vmem:[#allocation5 + $0x220] sm:$0xff]
    %v122 = vld [vmem:[#allocation5 + $0x228] sm:$0xff]
    %v123 = vld [vmem:[#allocation5 + $0x230] sm:$0xff]
    %v124 = vld [vmem:[#allocation5 + $0x238] sm:$0xff]
    %v125 = vld [vmem:[#allocation5 + $0x240] sm:$0xff]
    %v126 = vld [vmem:[#allocation5 + $0x248] sm:$0xff]
    %v127 = vld [vmem:[#allocation5 + $0x250] sm:$0xff]
    %v128 = vld [vmem:[#allocation5 + $0x258] sm:$0xff]
    %v129 = vld [vmem:[#allocation5 + $0x260] sm:$0xff]
    %v130 = vld [vmem:[#allocation5 + $0x268] sm:$0xff]
    %v131 = vld [vmem:[#allocation5 + $0x270] sm:$0xff]
    %v132 = vld [vmem:[#allocation5 + $0x278] sm:$0xff]
    %v133 = vld [vmem:[#allocation5 + $0x280] sm:$0xff]
    %v134 = vld [vmem:[#allocation5 + $0x288] sm:$0xff]
    %v135 = vld [vmem:[#allocation5 + $0x290] sm:$0xff]
    %v136 = vld [vmem:[#allocation5 + $0x298] sm:$0xff]
    %v137 = vld [vmem:[#allocation5 + $0x2a0] sm:$0xff]
    %v138 = vld [vmem:[#allocation5 + $0x2a8] sm:$0xff]
    %v139 = vld [vmem:[#allocation5 + $0x2b0] sm:$0xff]
    %v140 = vld [vmem:[#allocation5 + $0x2b8] sm:$0xff]
    %v141 = vld [vmem:[#allocation5 + $0x2c0] sm:$0xff]
    %v142 = vld [vmem:[#allocation5 + $0x2c8] sm:$0xff]
    %v143 = vld [vmem:[#allocation5 + $0x2d0] sm:$0xff]
    %v144 = vld [vmem:[#allocation5 + $0x2d8] sm:$0xff]
    %v145 = vld [vmem:[#allocation5 + $0x2e0] sm:$0xff]
    %v146 = vld [vmem:[#allocation5 + $0x2e8] sm:$0xff]
    %v147 = vld [vmem:[#allocation5 + $0x2f0] sm:$0xff]
    %v148 = vld [vmem:[#allocation5 + $0x2f8] sm:$0xff]
    %v149 = vld [vmem:[#allocation5 + $0x300] sm:$0xff]
    %v150 = vld [vmem:[#allocation5 + $0x308] sm:$0xff]
    %v151 = vld [vmem:[#allocation5 + $0x310] sm:$0xff]
    %v152 = vld [vmem:[#allocation5 + $0x318] sm:$0xff]
    %v153 = vld [vmem:[#allocation5 + $0x320] sm:$0xff]
    %v154 = vld [vmem:[#allocation5 + $0x328] sm:$0xff]
    %v155 = vld [vmem:[#allocation5 + $0x330] sm:$0xff]
    %v156 = vld [vmem:[#allocation5 + $0x338] sm:$0xff]
    %v157 = vld [vmem:[#allocation5 + $0x340] sm:$0xff]
    %v158 = vld [vmem:[#allocation5 + $0x348] sm:$0xff]
    %v159 = vld [vmem:[#allocation5 + $0x350] sm:$0xff]
    %v160 = vld [vmem:[#allocation5 + $0x358] sm:$0xff]
    %v161 = vld [vmem:[#allocation5 + $0x360] sm:$0xff]
    %v162 = vld [vmem:[#allocation5 + $0x368] sm:$0xff]
    %v163 = vld [vmem:[#allocation5 + $0x370] sm:$0xff]
    %v164 = vld [vmem:[#allocation5 + $0x378] sm:$0xff]
    %v165 = vld [vmem:[#allocation5 + $0x380] sm:$0xff]
    %v166 = vld [vmem:[#allocation5 + $0x388] sm:$0xff]
    %v167 = vld [vmem:[#allocation5 + $0x390] sm:$0xff]
    %v168 = vld [vmem:[#allocation5 + $0x398] sm:$0xff]
    %v169 = vld [vmem:[#allocation5 + $0x3a0] sm:$0xff]
    %v170 = vld [vmem:[#allocation5 + $0x3a8] sm:$0xff]
    %v171 = vld [vmem:[#allocation5 + $0x3b0] sm:$0xff]
    %v172 = vld [vmem:[#allocation5 + $0x3b8] sm:$0xff]
    %v173 = vld [vmem:[#allocation5 + $0x3c0] sm:$0xff]
    %v174 = vld [vmem:[#allocation5 + $0x3c8] sm:$0xff]
    %v175 = vld [vmem:[#allocation5 + $0x3d0] sm:$0xff]
    %v176 = vld [vmem:[#allocation5 + $0x3d8] sm:$0xff]
    %v177 = vld [vmem:[#allocation5 + $0x3e0] sm:$0xff]
    %v178 = vld [vmem:[#allocation5 + $0x3e8] sm:$0xff]
    %v179 = vld [vmem:[#allocation5 + $0x3f0] sm:$0xff]
    %v180 = vld [vmem:[#allocation5 + $0x3f8] sm:$0xff]
    %v181 = vld [vmem:[#allocation5 + $0x400] sm:$0xff]
    %v182 = vld [vmem:[#allocation5 + $0x408] sm:$0xff]
    %v183 = vld [vmem:[#allocation5 + $0x410] sm:$0xff]
    %v184 = vld [vmem:[#allocation5 + $0x418] sm:$0xff]
    %v185 = vld [vmem:[#allocation5 + $0x420] sm:$0xff]
    %v186 = vld [vmem:[#allocation5 + $0x428] sm:$0xff]
    %v187 = vld [vmem:[#allocation5 + $0x430] sm:$0xff]
    %v188 = vld [vmem:[#allocation5 + $0x438] sm:$0xff]
    %v189 = vld [vmem:[#allocation5 + $0x440] sm:$0xff]
    %v190 = vld [vmem:[#allocation5 + $0x448] sm:$0xff]
    %v191 = vld [vmem:[#allocation5 + $0x450] sm:$0xff]
    %v192 = vld [vmem:[#allocation5 + $0x458] sm:$0xff]
    %v193 = vld [vmem:[#allocation5 + $0x460] sm:$0xff]
    %v194 = vld [vmem:[#allocation5 + $0x468] sm:$0xff]
    %v195 = vld [vmem:[#allocation5 + $0x470] sm:$0xff]
    %v196 = vld [vmem:[#allocation5 + $0x478] sm:$0xff]
    %v197 = vld [vmem:[#allocation5 + $0x480] sm:$0xff]
    %v198 = vld [vmem:[#allocation5 + $0x488] sm:$0xff]
    %v199 = vld [vmem:[#allocation5 + $0x490] sm:$0xff]
    %v200 = vld [vmem:[#allocation5 + $0x498] sm:$0xff]
    %v201 = vld [vmem:[#allocation5 + $0x4a0] sm:$0xff]
    %v202 = vld [vmem:[#allocation5 + $0x4a8] sm:$0xff]
    %v203 = vld [vmem:[#allocation5 + $0x4b0] sm:$0xff]
    %v204 = vld [vmem:[#allocation5 + $0x4b8] sm:$0xff]
    %v205 = vld [vmem:[#allocation5 + $0x4c0] sm:$0xff]
    %v206 = vld [vmem:[#allocation5 + $0x4c8] sm:$0xff]
    %v207 = vld [vmem:[#allocation5 + $0x4d0] sm:$0xff]
    %v208 = vld [vmem:[#allocation5 + $0x4d8] sm:$0xff]
    %v209 = vld [vmem:[#allocation5 + $0x4e0] sm:$0xff]
    %v210 = vld [vmem:[#allocation5 + $0x4e8] sm:$0xff]
    %v211 = vld [vmem:[#allocation5 + $0x4f0] sm:$0xff]
    %v212 = vld [vmem:[#allocation5 + $0x4f8] sm:$0xff]
    %v213 = vld [vmem:[#allocation7] sm:$0x1f]
    %v215 = vlaneseq
    %v216 = vshrl.u32 %v215, 7
    %v217 = vsub.s32 0, %v216
    %v218 = vrot.slane %v52, %v217
    %v219 = vlaneseq
    %v220 = vshrl.u32 %v219, 7
    %v221 = vsub.s32 1, %v220
    %v222 = vrot.slane %v52, %v221
    %v226 = vlaneseq
    %v227 = vshrl.u32 %v226, 7
    %v228 = vsub.s32 0, %v227
    %v229 = vrot.slane %v213, %v228
    %v230 = vlaneseq
    %v231 = vshrl.u32 %v230, 7
    %v232 = vsub.s32 1, %v231
    %v233 = vrot.slane %v213, %v232
    %v234 = vlaneseq
    %v235 = vshrl.u32 %v234, 7
    %v236 = vsub.s32 2, %v235
    %v237 = vrot.slane %v213, %v236
    %v238 = vlaneseq
    %v239 = vshrl.u32 %v238, 7
    %v240 = vsub.s32 3, %v239
    %v241 = vrot.slane %v213, %v240
    %v242 = vlaneseq
    %v243 = vshrl.u32 %v242, 7
    %v244 = vsub.s32 4, %v243
    %v245 = vrot.slane %v213, %v244
    %251 = vmatprep.subr.mxu0 %v129
    %252 = vmatpush1.msra.mxu0 %v128
    %253 = vmatprep.subr.mxu0 %v124
    %254 = vmatpush1.msra.mxu0 %v123
    %255 = vmatprep.subr.mxu0 %v119
    %256 = vmatpush1.msra.mxu0 %v118
    %257 = vmatprep.subr.mxu0 %v114
    %258 = vmatpush1.msra.mxu0 %v113
    %259 = vmatprep.subr.mxu0 %v109
    %260 = vmatpush1.msra.mxu0 %v108
    %261 = vmatprep.subr.mxu0 %v104
    %262 = vmatpush1.msra.mxu0 %v103
    %263 = vmatprep.subr.mxu0 %v99
    %264 = vmatpush1.msra.mxu0 %v98
    %265 = vmatprep.subr.mxu0 %v94
    %266 = vmatpush1.msra.mxu0 %v93
    %267 = vmatprep.subr.mxu0 %v89
    %268 = vmatpush1.msra.mxu0 %v88
    %269 = vmatprep.subr.mxu0 %v84
    %270 = vmatpush1.msra.mxu0 %v83
    %271 = vmatprep.subr.mxu0 %v79
    %272 = vmatpush1.msra.mxu0 %v78
    %273 = vmatprep.subr.mxu0 %v74
    %274 = vmatpush1.msra.mxu0 %v73
    %275 = vmatprep.subr.mxu0 %v69
    %276 = vmatpush1.msra.mxu0 %v68
    %277 = vmatprep.subr.mxu0 %v64
    %278 = vmatpush1.msra.mxu0 %v63
    %279 = vmatprep.subr.mxu0 %v59
    %280 = vmatpush1.msra.mxu0 %v58
    %281 = vmatprep.subr.mxu0 %v54
    %282 = vmatpush1.msra.mxu0 %v53
    %283 = vmatprep.subr.mxu0 %v209
    %284 = vmatpush2.msra.mxu0 %v208
    %285 = vmatprep.subr.mxu0 %v204
    %286 = vmatpush2.msra.mxu0 %v203
    %287 = vmatprep.subr.mxu0 %v199
    %288 = vmatpush2.msra.mxu0 %v198
    %289 = vmatprep.subr.mxu0 %v194
    %290 = vmatpush2.msra.mxu0 %v193
    %291 = vmatprep.subr.mxu0 %v189
    %292 = vmatpush2.msra.mxu0 %v188
    %293 = vmatprep.subr.mxu0 %v184
    %294 = vmatpush2.msra.mxu0 %v183
    %295 = vmatprep.subr.mxu0 %v179
    %296 = vmatpush2.msra.mxu0 %v178
    %297 = vmatprep.subr.mxu0 %v174
    %298 = vmatpush2.msra.mxu0 %v173
    %299 = vmatprep.subr.mxu0 %v169
    %300 = vmatpush2.msra.mxu0 %v168
    %301 = vmatprep.subr.mxu0 %v164
    %302 = vmatpush2.msra.mxu0 %v163
    %303 = vmatprep.subr.mxu0 %v159
    %304 = vmatpush2.msra.mxu0 %v158
    %305 = vmatprep.subr.mxu0 %v154
    %306 = vmatpush2.msra.mxu0 %v153
    %307 = vmatprep.subr.mxu0 %v149
    %308 = vmatpush2.msra.mxu0 %v148
    %309 = vmatprep.subr.mxu0 %v144
    %310 = vmatpush2.msra.mxu0 %v143
    %311 = vmatprep.subr.mxu0 %v139
    %312 = vmatpush2.msra.mxu0 %v138
    %313 = vmatprep.subr.mxu0 %v134
    %314 = vmatpush2.msra.mxu0 %v133
    %315 = vmatprep.mubr.f32.mxu0 %v222
    %316 = vmatmul.mubr.f32.gmra.mxu0 %v218
    %v317 = vpop.f32.mrf.mxu0
    %v318 = vadd.f32 %v229, %v317
    %v319 = vpop.f32.mrf.mxu0
    %v320 = vadd.f32 %v233, %v319
    %321 = vdwg.mxu0
    %322 = vmatprep.subr.mxu0 %v131
    %323 = vmatpush1.msra.mxu0 %v130
    %324 = vmatprep.subr.mxu0 %v126
    %325 = vmatpush1.msra.mxu0 %v125
    %326 = vmatprep.subr.mxu0 %v121
    %327 = vmatpush1.msra.mxu0 %v120
    %328 = vmatprep.subr.mxu0 %v116
    %329 = vmatpush1.msra.mxu0 %v115
    %330 = vmatprep.subr.mxu0 %v111
    %331 = vmatpush1.msra.mxu0 %v110
    %332 = vmatprep.subr.mxu0 %v106
    %333 = vmatpush1.msra.mxu0 %v105
    %334 = vmatprep.subr.mxu0 %v101
    %335 = vmatpush1.msra.mxu0 %v100
    %336 = vmatprep.subr.mxu0 %v96
    %337 = vmatpush1.msra.mxu0 %v95
    %338 = vmatprep.subr.mxu0 %v91
    %339 = vmatpush1.msra.mxu0 %v90
    %340 = vmatprep.subr.mxu0 %v86
    %341 = vmatpush1.msra.mxu0 %v85
    %342 = vmatprep.subr.mxu0 %v81
    %343 = vmatpush1.msra.mxu0 %v80
    %344 = vmatprep.subr.mxu0 %v76
    %345 = vmatpush1.msra.mxu0 %v75
    %346 = vmatprep.subr.mxu0 %v71
    %347 = vmatpush1.msra.mxu0 %v70
    %348 = vmatprep.subr.mxu0 %v66
    %349 = vmatpush1.msra.mxu0 %v65
    %350 = vmatprep.subr.mxu0 %v61
    %351 = vmatpush1.msra.mxu0 %v60
    %352 = vmatprep.subr.mxu0 %v56
    %353 = vmatpush1.msra.mxu0 %v55
    %354 = vmatprep.subr.mxu0 %v211
    %355 = vmatpush2.msra.mxu0 %v210
    %356 = vmatprep.subr.mxu0 %v206
    %357 = vmatpush2.msra.mxu0 %v205
    %358 = vmatprep.subr.mxu0 %v201
    %359 = vmatpush2.msra.mxu0 %v200
    %360 = vmatprep.subr.mxu0 %v196
    %361 = vmatpush2.msra.mxu0 %v195
    %362 = vmatprep.subr.mxu0 %v191
    %363 = vmatpush2.msra.mxu0 %v190
    %364 = vmatprep.subr.mxu0 %v186
    %365 = vmatpush2.msra.mxu0 %v185
    %366 = vmatprep.subr.mxu0 %v181
    %367 = vmatpush2.msra.mxu0 %v180
    %368 = vmatprep.subr.mxu0 %v176
    %369 = vmatpush2.msra.mxu0 %v175
    %370 = vmatprep.subr.mxu0 %v171
    %371 = vmatpush2.msra.mxu0 %v170
    %372 = vmatprep.subr.mxu0 %v166
    %373 = vmatpush2.msra.mxu0 %v165
    %374 = vmatprep.subr.mxu0 %v161
    %375 = vmatpush2.msra.mxu0 %v160
    %376 = vmatprep.subr.mxu0 %v156
    %377 = vmatpush2.msra.mxu0 %v155
    %378 = vmatprep.subr.mxu0 %v151
    %379 = vmatpush2.msra.mxu0 %v150
    %380 = vmatprep.subr.mxu0 %v146
    %381 = vmatpush2.msra.mxu0 %v145
    %382 = vmatprep.subr.mxu0 %v141
    %383 = vmatpush2.msra.mxu0 %v140
    %384 = vmatprep.subr.mxu0 %v136
    %385 = vmatpush2.msra.mxu0 %v135
    %386 = vmatprep.mubr.f32.mxu0 %v222
    %387 = vmatmul.mubr.f32.gmra.mxu0 %v218
    %v388 = vpop.f32.mrf.mxu0
    %v389 = vadd.f32 %v237, %v388
    %v390 = vpop.f32.mrf.mxu0
    %v391 = vadd.f32 %v241, %v390
    %392 = vdwg.mxu0
    %393 = vmatprep.subr.mxu0 0.0
    %394 = vmatpush1.msra.mxu0 %v132
    %395 = vmatprep.subr.mxu0 0.0
    %396 = vmatpush1.msra.mxu0 %v127
    %397 = vmatprep.subr.mxu0 0.0
    %398 = vmatpush1.msra.mxu0 %v122
    %399 = vmatprep.subr.mxu0 0.0
    %400 = vmatpush1.msra.mxu0 %v117
    %401 = vmatprep.subr.mxu0 0.0
    %402 = vmatpush1.msra.mxu0 %v112
    %403 = vmatprep.subr.mxu0 0.0
    %404 = vmatpush1.msra.mxu0 %v107
    %405 = vmatprep.subr.mxu0 0.0
    %406 = vmatpush1.msra.mxu0 %v102
    %407 = vmatprep.subr.mxu0 0.0
    %408 = vmatpush1.msra.mxu0 %v97
    %409 = vmatprep.subr.mxu0 0.0
    %410 = vmatpush1.msra.mxu0 %v92
    %411 = vmatprep.subr.mxu0 0.0
    %412 = vmatpush1.msra.mxu0 %v87
    %413 = vmatprep.subr.mxu0 0.0
    %414 = vmatpush1.msra.mxu0 %v82
    %415 = vmatprep.subr.mxu0 0.0
    %416 = vmatpush1.msra.mxu0 %v77
    %417 = vmatprep.subr.mxu0 0.0
    %418 = vmatpush1.msra.mxu0 %v72
    %419 = vmatprep.subr.mxu0 0.0
    %420 = vmatpush1.msra.mxu0 %v67
    %421 = vmatprep.subr.mxu0 0.0
    %422 = vmatpush1.msra.mxu0 %v62
    %423 = vmatprep.subr.mxu0 0.0
    %424 = vmatpush1.msra.mxu0 %v57
    %425 = vmatprep.subr.mxu0 0.0
    %426 = vmatpush2.msra.mxu0 %v212
    %427 = vmatprep.subr.mxu0 0.0
    %428 = vmatpush2.msra.mxu0 %v207
    %429 = vmatprep.subr.mxu0 0.0
    %430 = vmatpush2.msra.mxu0 %v202
    %431 = vmatprep.subr.mxu0 0.0
    %432 = vmatpush2.msra.mxu0 %v197
    %433 = vmatprep.subr.mxu0 0.0
    %434 = vmatpush2.msra.mxu0 %v192
    %435 = vmatprep.subr.mxu0 0.0
    %436 = vmatpush2.msra.mxu0 %v187
    %437 = vmatprep.subr.mxu0 0.0
    %438 = vmatpush2.msra.mxu0 %v182
    %439 = vmatprep.subr.mxu0 0.0
    %440 = vmatpush2.msra.mxu0 %v177
    %441 = vmatprep.subr.mxu0 0.0
    %442 = vmatpush2.msra.mxu0 %v172
    %443 = vmatprep.subr.mxu0 0.0
    %444 = vmatpush2.msra.mxu0 %v167
    %445 = vmatprep.subr.mxu0 0.0
    %446 = vmatpush2.msra.mxu0 %v162
    %447 = vmatprep.subr.mxu0 0.0
    %448 = vmatpush2.msra.mxu0 %v157
    %449 = vmatprep.subr.mxu0 0.0
    %450 = vmatpush2.msra.mxu0 %v152
    %451 = vmatprep.subr.mxu0 0.0
    %452 = vmatpush2.msra.mxu0 %v147
    %453 = vmatprep.subr.mxu0 0.0
    %454 = vmatpush2.msra.mxu0 %v142
    %455 = vmatprep.subr.mxu0 0.0
    %456 = vmatpush2.msra.mxu0 %v137
    %457 = vmatprep.mubr.f32.mxu0 %v222
    %458 = vmatmul.mubr.f32.gmra.mxu0 %v218
    %v459 = vpop.f32.mrf.mxu0
    %v460 = vadd.f32 %v245, %v459
    %v461 = vpop.f32.mrf.mxu0
    %462 = vdwg.mxu0
    %v468 = vcombine.low %v318, %v320
    %v469 = vcombine.low %v389, %v391
    %v471 = vunpack.c.l.s4 1966171168
    %v472 = vunpack.c.0.s8 %v471
    %v473 = vlaneseq
    %v474 = vshrl.u32 %v473, 7
    %v475 = vsub.s32 %v472, %v474
    %v476 = vrot.slane %v468, %v475
    %v478 = vunpack.c.l.s4 1966171168
    %v479 = vunpack.c.0.s8 %v478
    %v480 = vlaneseq
    %v481 = vshrl.u32 %v480, 7
    %v482 = vsub.s32 %v479, %v481
    %v483 = vrot.slane %v469, %v482
    %v485 = vunpack.c.l.s4 1966171168
    %v486 = vunpack.c.0.s8 %v485
    %v487 = vlaneseq
    %v488 = vshrl.u32 %v487, 7
    %v489 = vsub.s32 %v486, %v488
    %v490 = vrot.slane %v460, %v489
    %v491 = vcombine.low %v476, %v483
    %v493 = vunpack.c.l.s4 1966171168
    %v494 = vunpack.c.0.s8 %v493
    %v495 = vlaneseq
    %v496 = vshrl.u32 %v495, 7
    %v497 = vsub.s32 %v494, %v496
    %v498 = vrot.slane %v491, %v497
    %v500 = vunpack.c.l.s4 1966171168
    %v501 = vunpack.c.0.s8 %v500
    %v502 = vlaneseq
    %v503 = vshrl.u32 %v502, 7
    %v504 = vsub.s32 %v501, %v503
    %v505 = vrot.slane %v490, %v504
    %v506 = vcombine.low %v498, %v505
    %v508 = vlaneseq
    %vm509 = vcmp.ge.s32.totalorder %v508, 0
    %vm510 = vcmp.lt.s32.totalorder %v508, 640
    %vm511 = vmand %vm509, %vm510
    %512 = vst.msk [vmem:[#allocation8] sm:$0x1f] %vm511, %v506
    // Predicated region
    $region26: #{tpu_custom_call.1} parent=1 // pred_check
      _
    $region27: #{tpu_custom_call.1} parent=1 // pred_check_branch
      %514 = sbr.rel (0) target = $region29
    $region28: #{tpu_custom_call.1} parent=1 // pred_region
      %s516 = ssub.s32 80, 80
      %517 = vsyncadd [#allocation4], %s516
      %s519 = sshll.u32 [#allocation8], 4
      %s520 = int_to_ptr.vmem [resolvable:$true] %s519
      %522 = dma.vmem_to_hbm [thread:$0]  %s520, 80, %s3, [#allocation4]
    $region29: #{tpu_custom_call.1} parent=1 // pred_fallthru
      _
    // Predicated region
    $region30: #{tpu_custom_call.1} parent=1 // pred_check
      _
    $region31: #{tpu_custom_call.1} parent=1 // pred_check_branch
      %524 = sbr.rel (0) target = $region33
    $region32: #{tpu_custom_call.1} parent=1 // pred_region
      %525 = dma.done [#allocation4], 80
    $region33: #{tpu_custom_call.1} parent=1 // pred_fallthru
      _
    %526 = vsyncpa [#allocation3], 1
    %527 = vsyncpa [#allocation6], 1
    %528 = vsyncpa [#allocation4], 1

</llo_original>
